<compile_context>
chip_gen: v7x
topology: tpu7x:2x2x1
jax: 0.10.0
libtpu: 0.0.40
codegen_flags: <defaults>
</compile_context>

<pallas_src>
import functools
import math

import numpy as np
import jax
import jax.numpy as jnp
from jax import lax
from jax.experimental import pallas as pl
from jax.experimental.pallas import tpu as pltpu


LANE = 128


def _round_up(x, m):
    return ((x + m - 1) // m) * m


def _pick_batch_block(batch, max_blk=8):
    """Largest divisor of `batch` not exceeding max_blk (batch rows per step)."""
    for cand in range(min(batch, max_blk), 0, -1):
        if batch % cand == 0:
            return cand
    return 1


# ---------------------------------------------------------------- kernels --

def _supports_kernel(emb_ref, cheb_ref, *, cheb_k):
    """softmax(relu(E E^T)) and its Chebyshev stack T_1..T_{K-1} (T_0=I implicit)."""
    E = emb_ref[...]                                                  # (N, Demb)
    logits = lax.dot_general(E, E, (((1,), (1,)), ((), ())),
                             preferred_element_type=jnp.float32)      # E @ E.T
    logits = jnp.maximum(logits, 0.0)
    m = jnp.max(logits, axis=-1, keepdims=True)
    ex = jnp.exp(logits - m)
    sup = ex / jnp.sum(ex, axis=-1, keepdims=True)                    # (N, N)

    N = sup.shape[0]
    Ts = [None, sup]                      # Ts[0] = I, never materialized
    for k in range(2, cheb_k):
        nxt = 2.0 * jnp.dot(sup, Ts[k - 1], preferred_element_type=jnp.float32)
        if k == 2:                        # subtract I via iota (no eye build)
            row = lax.broadcasted_iota(jnp.int32, (N, N), 0)
            col = lax.broadcasted_iota(jnp.int32, (N, N), 1)
            nxt = nxt - (row == col).astype(jnp.float32)
        else:
            nxt = nxt - Ts[k - 2]
        Ts.append(nxt)
    cheb_ref[...] = jnp.stack(Ts[1:], axis=0)                         # (K-1,N,N)


def _step_kernel(cheb_ref, x_ref, s_ref, *rest,
                 num_layers, cheb_k, b_blk, n_nodes, d_pad):
    """All L AGCRN-GRU cells for one block of b_blk batch elements.

    Row layout: rows = (b, n) stacked along the sublane axis (b_blk*N rows).
    Hidden lanes are padded to d_pad (multiple of 128) so the z/r split and the
    final store are lane-tile aligned.
    """
    out_ref = rest[-1]
    p_refs = rest[:-1]                    # 6 refs per layer
    N = n_nodes

    Ts = [cheb_ref[k] for k in range(cheb_k - 1)]       # T_1 .. T_{K-1}

    def propagate(v):
        """[v, T_1 v, ..., T_{K-1} v]; graph prop applied per batch slab of rows."""
        outs = [v]
        for T in Ts:
            parts = [jnp.dot(T, v[b * N:(b + 1) * N],
                             preferred_element_type=jnp.float32)
                     for b in range(b_blk)]
            outs.append(parts[0] if b_blk == 1
                        else jnp.concatenate(parts, axis=0))   # sublane-aligned
        return outs

    cur = x_ref[...]                                    # (rows, Din or d_pad)
    hs = []
    for layer in range(num_layers):
        gxw, gsw, gb, cxw, csw, cb = p_refs[6 * layer: 6 * layer + 6]
        sb = s_ref[layer]                               # (rows, d_pad)

        xs = propagate(cur)               # reused by gate & candidate gconvs
        sk = propagate(sb)

        # fused z|r gate gconv: per-(k, source) weight blocks, no feat concat
        g = gb[...]                                     # (1, 2*d_pad) -> bcast
        for k in range(cheb_k):
            g = g + jnp.dot(xs[k], gxw[k], preferred_element_type=jnp.float32)
            g = g + jnp.dot(sk[k], gsw[k], preferred_element_type=jnp.float32)
        z = jax.nn.sigmoid(g[:, :d_pad])                # 128-lane aligned split
        r = jax.nn.sigmoid(g[:, d_pad:])

        zsk = propagate(z * sb)           # only the state side changes
        c = cb[...]
        for k in range(cheb_k):
            c = c + jnp.dot(xs[k], cxw[k], preferred_element_type=jnp.float32)
            c = c + jnp.dot(zsk[k], csw[k], preferred_element_type=jnp.float32)
        hc = jnp.tanh(c)

        h = r * sb + (1.0 - r) * hc                     # (rows, d_pad)
        hs.append(h)
        cur = h

    # one lane-dense store of every layer's hidden state
    out_ref[...] = jnp.stack(hs, axis=0)                # (L, rows, d_pad)


# ----------------------------------------------------------------- wrapper --

def compute_cheb_supports(node_emb, cheb_k):
    """Prologue kernel: adaptive supports + Chebyshev stack, computed once."""
    assert cheb_k >= 2
    N = node_emb.shape[0]
    return pl.pallas_call(
        functools.partial(_supports_kernel, cheb_k=cheb_k),
        out_shape=jax.ShapeDtypeStruct((cheb_k - 1, N, N), jnp.float32),
    )(node_emb)


def adcrnn_step_packed(x2, states, cheb, flat_params, *,
                       num_layers, cheb_k, n_nodes, b_blk, d_pad):
    """Step on pre-packed operands.  `states` (L, B*N, d_pad) is aliased to the
    output, so a decode loop can carry the padded hidden state with no copy."""
    rows, din = x2.shape
    batch = rows // n_nodes
    rows_blk = b_blk * n_nodes
    grid = (batch // b_blk,)

    def bcast(a):                         # full array, same block every step
        zero = (0,) * a.ndim
        return pl.BlockSpec(a.shape, lambda i, z=zero: z)

    in_specs = ([bcast(cheb),
                 pl.BlockSpec((rows_blk, din), lambda i: (i, 0)),
                 pl.BlockSpec((num_layers, rows_blk, d_pad),
                              lambda i: (0, i, 0))]
                + [bcast(a) for a in flat_params])

    kernel = functools.partial(_step_kernel, num_layers=num_layers,
                               cheb_k=cheb_k, b_blk=b_blk,
                               n_nodes=n_nodes, d_pad=d_pad)

    return pl.pallas_call(
        kernel,
        out_shape=jax.ShapeDtypeStruct((num_layers, rows, d_pad), jnp.float32),
        grid=grid,
        in_specs=in_specs,
        out_specs=pl.BlockSpec((num_layers, rows_blk, d_pad),
                               lambda i: (0, i, 0)),
        input_output_aliases={2: 0},               # state buffer -> hidden buffer
        compiler_params=pltpu.CompilerParams(
            dimension_semantics=("parallel",),     # megacore over batch blocks
            vmem_limit_bytes=32 * 1024 * 1024),    # explicit budget (v7x-safe)
    )(cheb, x2, states, *flat_params)


def adcrnn_step(xt, init_states, node_emb, layer_params):
    """Convenience wrapper matching ADCRNN_STEP.forward (packs / unpacks once)."""
    B, N, Din = xt.shape
    L = len(layer_params)
    K = layer_params[0]["cheb_k"]
    Dout = layer_params[0]["dim_out"]
    d_pad = _round_up(Dout, LANE)
    b_blk = _pick_batch_block(B)

    cheb = compute_cheb_supports(node_emb, K)          # hoisted: once per graph

    x2 = xt.reshape(B * N, Din)
    states = jnp.stack(init_states, axis=0).reshape(L, B * N, Dout)
    if d_pad > Dout:
        states = jnp.pad(states, ((0, 0), (0, 0), (0, d_pad - Dout)))

    flat_params = []
    for p in layer_params:
        flat_params.extend(p["kernel"])

    out = adcrnn_step_packed(x2, states, cheb, flat_params,
                             num_layers=L, cheb_k=K, n_nodes=N,
                             b_blk=b_blk, d_pad=d_pad)

    hidden = [out[l, :, :Dout].reshape(B, N, Dout) for l in range(L)]
    return hidden[-1], hidden


# --------------------------------------------------------- params & reference --

def xavier_normal(key, shape):
    fan_in, fan_out = shape
    std = math.sqrt(2.0 / (fan_in + fan_out))
    return (std * jax.random.normal(key, shape)).astype(jnp.float32)


def make_layer_params(key, din, dout, K, x_width):
    """x_width = lane width of the x operand the kernel sees for this layer
    (true Din for layer 0, padded hidden width d_pad for later layers)."""
    assert x_width >= din
    kg, ku = jax.random.split(key)
    C = din + dout
    d_pad = _round_up(dout, LANE)

    Wg = xavier_normal(kg, (K * C, 2 * dout))     # gate AGCN weights (z|r cols)
    bg = jnp.zeros((2 * dout,), jnp.float32)
    Wu = xavier_normal(ku, (K * C, dout))         # update/candidate AGCN weights
    bu = jnp.zeros((dout,), jnp.float32)

    # kernel packing: per-(k, source) blocks, z/r columns padded to 128 lanes
    gxw = jnp.zeros((K, x_width, 2 * d_pad), jnp.float32)
    gsw = jnp.zeros((K, d_pad, 2 * d_pad), jnp.float32)
    cxw = jnp.zeros((K, x_width, d_pad), jnp.float32)
    csw = jnp.zeros((K, d_pad, d_pad), jnp.float32)
    for k in range(K):
        wk, uk = Wg[k * C:(k + 1) * C], Wu[k * C:(k + 1) * C]
        gxw = gxw.at[k, :din, :dout].set(wk[:din, :dout])                # z, x-side
        gxw = gxw.at[k, :din, d_pad:d_pad + dout].set(wk[:din, dout:])   # r, x-side
        gsw = gsw.at[k, :dout, :dout].set(wk[din:, :dout])               # z, s-side
        gsw = gsw.at[k, :dout, d_pad:d_pad + dout].set(wk[din:, dout:])  # r, s-side
        cxw = cxw.at[k, :din, :dout].set(uk[:din])
        csw = csw.at[k, :dout, :dout].set(uk[din:])
    gb = (jnp.zeros((1, 2 * d_pad), jnp.float32)
          .at[0, :dout].set(bg[:dout])
          .at[0, d_pad:d_pad + dout].set(bg[dout:]))
    cb = jnp.zeros((1, d_pad), jnp.float32).at[0, :dout].set(bu)

    return {"kernel": (gxw, gsw, gb, cxw, csw, cb),
            "ref": (Wg, bg, Wu, bu),
            "cheb_k": K, "dim_out": dout}


def agcn_ref(x, E, W, b, K):
    N = E.shape[0]
    sup = jax.nn.softmax(jax.nn.relu(E @ E.T), axis=1)
    Ts = [jnp.eye(N, dtype=jnp.float32), sup]
    for _ in range(2, K):
        Ts.append(jnp.matmul(2.0 * sup, Ts[-1]) - Ts[-2])
    xg = jnp.concatenate([jnp.einsum('nm,bmc->bnc', T, x) for T in Ts], axis=-1)
    return jnp.einsum('bni,io->bno', xg, W) + b


def cell_ref(x, state, E, params, K, Dout):
    Wg, bg, Wu, bu = params
    ias = jnp.concatenate([x, state], axis=-1)
    zr = jax.nn.sigmoid(agcn_ref(ias, E, Wg, bg, K))
    z, r = zr[..., :Dout], zr[..., Dout:]
    cand = jnp.concatenate([x, z * state], axis=-1)
    hc = jnp.tanh(agcn_ref(cand, E, Wu, bu, K))
    return r * state + (1.0 - r) * hc


def adcrnn_step_ref(xt, init_states, node_emb, layer_params, K, Dout):
    current = xt
    hidden = []
    for i, p in enumerate(layer_params):
        state = cell_ref(current, init_states[i], node_emb, p["ref"], K, Dout)
        hidden.append(state)
        current = state
    return current, hidden


# --------------------------------------------------------------------- main --

if __name__ == "__main__":
    B, N, Din, Dout, K, Demb, L = 2, 16, 2, 32, 3, 8, 2

    key = jax.random.PRNGKey(0)
    k_x, k_e, k_s, k_p = jax.random.split(key, 4)

    xt = jax.random.normal(k_x, (B, N, Din), jnp.float32)
    node_emb = jax.random.normal(k_e, (N, Demb), jnp.float32)
    s_keys = jax.random.split(k_s, L)
    init_states = [0.1 * jax.random.normal(s_keys[i], (B, N, Dout), jnp.float32)
                   for i in range(L)]

    d_pad = _round_up(Dout, LANE)
    p_keys = jax.random.split(k_p, L)
    layer_params = []
    for i in range(L):
        din_i = Din if i == 0 else Dout
        x_width = Din if i == 0 else d_pad
        layer_params.append(make_layer_params(p_keys[i], din_i, Dout, K, x_width))

    out, hidden = adcrnn_step(xt, init_states, node_emb, layer_params)
    out = jax.block_until_ready(out)
    hidden = [jax.block_until_ready(h) for h in hidden]

    ref_out, ref_hidden = adcrnn_step_ref(xt, init_states, node_emb,
                                          layer_params, K, Dout)

    np.testing.assert_allclose(np.asarray(out), np.asarray(ref_out),
                               rtol=1e-4, atol=1e-4)
    for h, rh in zip(hidden, ref_hidden):
        np.testing.assert_allclose(np.asarray(h), np.asarray(rh),
                                   rtol=1e-4, atol=1e-4)

    print("KERNEL_OK")
</pallas_src>

<mosaic_0001>
module attributes {stable_mosaic.version = 11 : i64} {
  func.func @_supports_kernel(%arg0: memref<16x8xf32, #tpu.memory_space<vmem>>, %arg1: memref<2x16x16xf32, #tpu.memory_space<vmem>>) attributes {dimension_semantics = [], scalar_prefetch = 0 : i64, scratch_operands = 0 : i64, tpu.core_type = #tpu.core_type<tc>} {
    %c0 = arith.constant 0 : index
    %c0_0 = arith.constant 0 : index
    %0 = vector.load %arg0[%c0, %c0_0] : memref<16x8xf32, #tpu.memory_space<vmem>>, vector<16x8xf32>
    %cst = arith.constant dense<0.000000e+00> : vector<16x16xf32>
    %1 = tpu.matmul %0, %0, %cst {dimension_numbers = #tpu.dot_dimension_numbers<[1], [1], [0], [0], [0, 0, 1, 0], [], []>} : vector<16x8xf32>, vector<16x8xf32>, vector<16x16xf32> -> vector<16x16xf32>
    %cst_1 = arith.constant 0.000000e+00 : f32
    %2 = vector.broadcast %cst_1 : f32 to vector<16x16xf32>
    %3 = arith.maximumf %1, %2 : vector<16x16xf32>
    %cst_2 = arith.constant dense<0xFF800000> : vector<16xf32>
    %4 = vector.multi_reduction <maximumf>, %3, %cst_2 [1] : vector<16x16xf32> to vector<16xf32>
    %5 = vector.shape_cast %4 : vector<16xf32> to vector<16x1xf32>
    %6 = vector.broadcast %5 : vector<16x1xf32> to vector<16x16xf32>
    %7 = arith.subf %3, %6 : vector<16x16xf32>
    %8 = math.exp %7 : vector<16x16xf32>
    %cst_3 = arith.constant dense<0.000000e+00> : vector<16xf32>
    %9 = vector.multi_reduction <add>, %8, %cst_3 [1] : vector<16x16xf32> to vector<16xf32>
    %10 = vector.shape_cast %9 : vector<16xf32> to vector<16x1xf32>
    %11 = vector.broadcast %10 : vector<16x1xf32> to vector<16x16xf32>
    %12 = arith.divf %8, %11 : vector<16x16xf32>
    %cst_4 = arith.constant dense<0.000000e+00> : vector<16x16xf32>
    %13 = tpu.matmul %12, %12, %cst_4 {dimension_numbers = #tpu.dot_dimension_numbers<[1], [0], [0], [1], [0, 0, 1, 1], [], []>} : vector<16x16xf32>, vector<16x16xf32>, vector<16x16xf32> -> vector<16x16xf32>
    %cst_5 = arith.constant 2.000000e+00 : f32
    %14 = vector.broadcast %cst_5 : f32 to vector<16x16xf32>
    %15 = arith.mulf %14, %13 : vector<16x16xf32>
    %16 = tpu.iota {dimensions = array<i32: 0>} : vector<16x16xi32>
    %17 = tpu.iota {dimensions = array<i32: 1>} : vector<16x16xi32>
    %18 = arith.cmpi eq, %16, %17 : vector<16x16xi32>
    %19 = arith.extui %18 : vector<16x16xi1> to vector<16x16xi32>
    %20 = arith.sitofp %19 : vector<16x16xi32> to vector<16x16xf32>
    %21 = arith.subf %15, %20 : vector<16x16xf32>
    %22 = vector.shape_cast %12 : vector<16x16xf32> to vector<1x16x16xf32>
    %23 = vector.shape_cast %21 : vector<16x16xf32> to vector<1x16x16xf32>
    %24 = tpu.concatenate %22, %23 in 0 : vector<1x16x16xf32>, vector<1x16x16xf32> -> vector<2x16x16xf32>
    %c0_6 = arith.constant 0 : index
    %c0_7 = arith.constant 0 : index
    %c0_8 = arith.constant 0 : index
    %25 = vector.load %arg1[%c0_6, %c0_7, %c0_8] : memref<2x16x16xf32, #tpu.memory_space<vmem>>, vector<2x16x16xf32>
    tpu.vector_store %arg1[%c0_6, %c0_7, %c0_8], %24 {strides = array<i32>} : memref<2x16x16xf32, #tpu.memory_space<vmem>>, vector<2x16x16xf32>,
    return
  }
}

</mosaic_0001>

<llo_original>
// kernel: tpu_custom_call.1
$region0: #{tpu_custom_call.1}
  #allocation0 [shape = 'u32[]', space=smem, size = 0x4, offset = 0x4, fixed_abs, tag = 'smem constant byte address 0x4 - core index']
  #allocation1 [shape = 'u32[144,128]{1,0:T(1,128)}', space=vmem, size = 0x12000, scoped, tag = 'internal scratch']
  %s0 = inlined_call_operand.vmem [shape: f32[16,8], index: 0, kind: input, shape index: {}]
  %s1 = inlined_call_operand.hbm [shape: f32[2,16,16], index: 1, kind: output, shape index: {}]
  %s2 = sld [smem:[#allocation0]]
  $region14: #{tpu_custom_call.1} parent=0
    _
  %s4 = ssub.s32 1, %s2
  %s5 = scalar_select 0, %s4, %s2
  $region1: #{tpu_custom_call.1} parent=0
    #allocation2 [shape = 'u8[16384]{0}', space=vmem, size = 0x4000, scoped, tag = 'output window, operand 0, single buffered']
    #allocation3 [shape = 's32[1]{0}', space=sflag, size = 0x4, scoped, tag = 'scoped memory for tpu_custom_call.1']
    %6 = vsyncpa [#allocation3], 0
    // Predicated region
    $region2: #{tpu_custom_call.1} parent=1 // pred_check
      _
    $region3: #{tpu_custom_call.1} parent=1 // pred_check_branch
      %8 = sbr.rel (0) target = $region5
    $region4: #{tpu_custom_call.1} parent=1 // pred_region
      _
    $region5: #{tpu_custom_call.1} parent=1 // pred_fallthru
      _
    %v9 = vld [vmem:[%s0] sm:$0xff]
    %v10 = vld [vmem:[%s0 + $0x8] sm:$0xff]
    %vm11 = vcmask 64512
    %v13 = vsel %vm11, %v9, 0
    %v16 = vsel %vm11, %v10, 0
    %18 = vmatprep.subr.mxu0 0.0
    %19 = vmatpush1.xpose.msra.mxu0 %v13
    %20 = vmatprep.subr.mxu0 0.0
    %21 = vmatpush1.xpose.msra.mxu0 %v16
    %22 = vmatprep.subr.mxu0 0.0
    %23 = vmatpush1.xpose.msra.mxu0 0.0
    %24 = vmatprep.subr.mxu0 0.0
    %25 = vmatpush1.xpose.msra.mxu0 0.0
    %26 = vmatprep.subr.mxu0 0.0
    %27 = vmatpush1.xpose.msra.mxu0 0.0
    %28 = vmatprep.subr.mxu0 0.0
    %29 = vmatpush1.xpose.msra.mxu0 0.0
    %30 = vmatprep.subr.mxu0 0.0
    %31 = vmatpush1.xpose.msra.mxu0 0.0
    %32 = vmatprep.subr.mxu0 0.0
    %33 = vmatpush1.xpose.msra.mxu0 0.0
    %34 = vmatprep.subr.mxu0 0.0
    %35 = vmatpush1.xpose.msra.mxu0 0.0
    %36 = vmatprep.subr.mxu0 0.0
    %37 = vmatpush1.xpose.msra.mxu0 0.0
    %38 = vmatprep.subr.mxu0 0.0
    %39 = vmatpush1.xpose.msra.mxu0 0.0
    %40 = vmatprep.subr.mxu0 0.0
    %41 = vmatpush1.xpose.msra.mxu0 0.0
    %42 = vmatprep.subr.mxu0 0.0
    %43 = vmatpush1.xpose.msra.mxu0 0.0
    %44 = vmatprep.subr.mxu0 0.0
    %45 = vmatpush1.xpose.msra.mxu0 0.0
    %46 = vmatprep.subr.mxu0 0.0
    %47 = vmatpush1.xpose.msra.mxu0 0.0
    %48 = vmatprep.subr.mxu0 0.0
    %49 = vmatpush1.xpose.msra.mxu0 0.0
    %50 = vmatprep.subr.mxu0 0.0
    %51 = vmatpush1.xpose.msra.mxu0 0.0
    %52 = vmatprep.subr.mxu0 0.0
    %53 = vmatpush1.xpose.msra.mxu0 0.0
    %54 = vmatprep.subr.mxu0 0.0
    %55 = vmatpush1.xpose.msra.mxu0 0.0
    %56 = vmatprep.subr.mxu0 0.0
    %57 = vmatpush1.xpose.msra.mxu0 0.0
    %58 = vmatprep.subr.mxu0 0.0
    %59 = vmatpush1.xpose.msra.mxu0 0.0
    %60 = vmatprep.subr.mxu0 0.0
    %61 = vmatpush1.xpose.msra.mxu0 0.0
    %62 = vmatprep.subr.mxu0 0.0
    %63 = vmatpush1.xpose.msra.mxu0 0.0
    %64 = vmatprep.subr.mxu0 0.0
    %65 = vmatpush1.xpose.msra.mxu0 0.0
    %66 = vmatprep.subr.mxu0 0.0
    %67 = vmatpush1.xpose.msra.mxu0 0.0
    %68 = vmatprep.subr.mxu0 0.0
    %69 = vmatpush1.xpose.msra.mxu0 0.0
    %70 = vmatprep.subr.mxu0 0.0
    %71 = vmatpush1.xpose.msra.mxu0 0.0
    %72 = vmatprep.subr.mxu0 0.0
    %73 = vmatpush1.xpose.msra.mxu0 0.0
    %74 = vmatprep.subr.mxu0 0.0
    %75 = vmatpush1.xpose.msra.mxu0 0.0
    %76 = vmatprep.subr.mxu0 0.0
    %77 = vmatpush1.xpose.msra.mxu0 0.0
    %78 = vmatprep.subr.mxu0 0.0
    %79 = vmatpush1.xpose.msra.mxu0 0.0
    %80 = vmatprep.subr.mxu0 0.0
    %81 = vmatpush1.xpose.msra.mxu0 0.0
    %82 = vmatprep.mubr.f32.mxu0 0.0
    %83 = vmatmul.mubr.f32.gmra.mrb[0].mxu0 %v13
    %v84 = vpop.f32.mrb[0].mxu0
    %v85 = vadd.f32 0.0, %v84
    %v86 = vpop.f32.mrb[0].mxu0
    %87 = vmatprep.mubr.f32.mxu0 0.0
    %88 = vmatmul.mubr.f32.gmra.mrb[0].mxu0 %v16
    %v89 = vpop.f32.mrb[0].mxu0
    %v90 = vadd.f32 0.0, %v89
    %v91 = vpop.f32.mrb[0].mxu0
    %92 = vdwg.mxu0
    %v93 = vmax.f32 %v85, 0.0
    %v94 = vmax.f32 %v90, 0.0
    %vm95 = vcmask 130048
    %v96 = vsel %vm95, %v93, -inf
    %97 = vmax.xlane.f32.xlu0 %v96
    %v98 = vpop.xlane.xlu0 %97
    %v99 = vsel %vm95, %v94, -inf
    %100 = vmax.xlane.f32.xlu0 %v99
    %v101 = vpop.xlane.xlu0 %100
    %v102 = vsub.f32 %v93, %v98
    %v103 = vsub.f32 %v94, %v101
    %v104 = vmul.f32 %v102, 1.442695
    %v105 = vpow.pop %v104
    %v106 = vmul.f32 %v103, 1.442695
    %v107 = vpow.pop %v106
    %v108 = vsel %vm95, %v105, 0.0
    %109 = vadd.xlane.f32.xlu0 %v108
    %v110 = vpop.xlane.xlu0 %109
    %v111 = vsel %vm95, %v107, 0.0
    %112 = vadd.xlane.f32.xlu0 %v111
    %v113 = vpop.xlane.xlu0 %112
    %v114 = vrcp.pop %v110
    %v115 = vmul.f32 %v105, %v114
    %v116 = vrcp.pop %v113
    %v117 = vmul.f32 %v107, %v116
    %v119 = vsel %vm95, %v115, 0
    %v122 = vsel %vm95, %v117, 0
    %124 = vmatprep.subr.mxu0 0.0
    %125 = vmatpush1.msra.mxu0 %v115
    %126 = vmatprep.subr.mxu0 0.0
    %127 = vmatpush1.msra.mxu0 %v117
    %128 = vmatprep.subr.mxu0 0.0
    %129 = vmatpush1.msra.mxu0 0.0
    %130 = vmatprep.subr.mxu0 0.0
    %131 = vmatpush1.msra.mxu0 0.0
    %132 = vmatprep.subr.mxu0 0.0
    %133 = vmatpush1.msra.mxu0 0.0
    %134 = vmatprep.subr.mxu0 0.0
    %135 = vmatpush1.msra.mxu0 0.0
    %136 = vmatprep.subr.mxu0 0.0
    %137 = vmatpush1.msra.mxu0 0.0
    %138 = vmatprep.subr.mxu0 0.0
    %139 = vmatpush1.msra.mxu0 0.0
    %140 = vmatprep.subr.mxu0 0.0
    %141 = vmatpush1.msra.mxu0 0.0
    %142 = vmatprep.subr.mxu0 0.0
    %143 = vmatpush1.msra.mxu0 0.0
    %144 = vmatprep.subr.mxu0 0.0
    %145 = vmatpush1.msra.mxu0 0.0
    %146 = vmatprep.subr.mxu0 0.0
    %147 = vmatpush1.msra.mxu0 0.0
    %148 = vmatprep.subr.mxu0 0.0
    %149 = vmatpush1.msra.mxu0 0.0
    %150 = vmatprep.subr.mxu0 0.0
    %151 = vmatpush1.msra.mxu0 0.0
    %152 = vmatprep.subr.mxu0 0.0
    %153 = vmatpush1.msra.mxu0 0.0
    %154 = vmatprep.subr.mxu0 0.0
    %155 = vmatpush1.msra.mxu0 0.0
    %156 = vmatprep.subr.mxu0 0.0
    %157 = vmatpush1.msra.mxu0 0.0
    %158 = vmatprep.subr.mxu0 0.0
    %159 = vmatpush1.msra.mxu0 0.0
    %160 = vmatprep.subr.mxu0 0.0
    %161 = vmatpush1.msra.mxu0 0.0
    %162 = vmatprep.subr.mxu0 0.0
    %163 = vmatpush1.msra.mxu0 0.0
    %164 = vmatprep.subr.mxu0 0.0
    %165 = vmatpush1.msra.mxu0 0.0
    %166 = vmatprep.subr.mxu0 0.0
    %167 = vmatpush1.msra.mxu0 0.0
    %168 = vmatprep.subr.mxu0 0.0
    %169 = vmatpush1.msra.mxu0 0.0
    %170 = vmatprep.subr.mxu0 0.0
    %171 = vmatpush1.msra.mxu0 0.0
    %172 = vmatprep.subr.mxu0 0.0
    %173 = vmatpush1.msra.mxu0 0.0
    %174 = vmatprep.subr.mxu0 0.0
    %175 = vmatpush1.msra.mxu0 0.0
    %176 = vmatprep.subr.mxu0 0.0
    %177 = vmatpush1.msra.mxu0 0.0
    %178 = vmatprep.subr.mxu0 0.0
    %179 = vmatpush1.msra.mxu0 0.0
    %180 = vmatprep.subr.mxu0 0.0
    %181 = vmatpush1.msra.mxu0 0.0
    %182 = vmatprep.subr.mxu0 0.0
    %183 = vmatpush1.msra.mxu0 0.0
    %184 = vmatprep.subr.mxu0 0.0
    %185 = vmatpush1.msra.mxu0 0.0
    %186 = vmatprep.subr.mxu0 0.0
    %187 = vmatpush1.msra.mxu0 0.0
    %188 = vmatprep.mubr.f32.mxu0 0.0
    %189 = vmatmul.mubr.f32.gmra.mrb[0].mxu0 %v119
    %v190 = vpop.f32.mrb[0].mxu0
    %v191 = vadd.f32 0.0, %v190
    %v192 = vpop.f32.mrb[0].mxu0
    %193 = vmatprep.mubr.f32.mxu0 0.0
    %194 = vmatmul.mubr.f32.gmra.mrb[0].mxu0 %v122
    %v195 = vpop.f32.mrb[0].mxu0
    %v196 = vadd.f32 0.0, %v195
    %v197 = vpop.f32.mrb[0].mxu0
    %198 = vdwg.mxu0
    %v199 = vmul.f32 %v191, 2.0
    %v200 = vmul.f32 %v196, 2.0
    %v201 = vlaneseq
    %v202 = vshrl.u32 %v201, 7
    %v203 = vadd.s32 %v202, 8
    %v204 = vlaneseq
    %v205 = vand.u32 %v204, 127
    %vm206 = vcmp.eq.s32.totalorder %v202, %v205
    %vm207 = vcmp.eq.s32.totalorder %v203, %v205
    %v208 = vsel %vm206, 1, 0
    %v209 = vsel %vm207, 1, 0
    %v210 = vcvt.s32.f32 %v208
    %v211 = vcvt.s32.f32 %v209
    %v212 = vsub.f32 %v199, %v210
    %v213 = vsub.f32 %v200, %v211
    %214 = vst.msk [vmem:[#allocation2] sm:$0xff] %vm95, %v115
    %215 = vst.msk [vmem:[#allocation2 + $0x8] sm:$0xff] %vm95, %v117
    %216 = vst.msk [vmem:[#allocation2 + $0x10] sm:$0xff] %vm95, %v212
    %217 = vst.msk [vmem:[#allocation2 + $0x18] sm:$0xff] %vm95, %v213
    // Predicated region
    $region6: #{tpu_custom_call.1} parent=1 // pred_check
      _
    $region7: #{tpu_custom_call.1} parent=1 // pred_check_branch
      %219 = sbr.rel (0) target = $region9
    $region8: #{tpu_custom_call.1} parent=1 // pred_region
      %s221 = ssub.s32 512, 512
      %222 = vsyncadd [#allocation3], %s221
      %s223 = sshll.u32 [#allocation2], 4
      %s224 = int_to_ptr.vmem [resolvable:$true] %s223
      %229 = dma.vmem_to_hbm [thread:$0]  %s224, 512, %s1, [#allocation3], 128, 128, 8
    $region9: #{tpu_custom_call.1} parent=1 // pred_fallthru
      _
    // Predicated region
    $region10: #{tpu_custom_call.1} parent=1 // pred_check
      _
    $region11: #{tpu_custom_call.1} parent=1 // pred_check_branch
      %231 = sbr.rel (0) target = $region13
    $region12: #{tpu_custom_call.1} parent=1 // pred_region
      %232 = dma.done [#allocation3], 512
    $region13: #{tpu_custom_call.1} parent=1 // pred_fallthru
      _
    %233 = vsyncpa [#allocation3], 1

</llo_original>
